<compile_context>
chip_gen: v6e
topology: v6e:2x2x1
jax: 0.10.0
libtpu: 0.0.40
codegen_flags: <defaults>
</compile_context>

<pallas_src>
import jax
import jax.numpy as jnp
from jax.experimental import pallas as pl
from jax.experimental.pallas import tpu as pltpu


def _attention_kernel(h_ref, w_ref, o_ref):
    # h_ref: (Bt, S, H) VMEM tile of hidden states (native dtype)
    # w_ref: (1, H)     VMEM lane-dense linear weight
    # o_ref: (Bt, H)    VMEM output tile (sublane/lane dense)
    h = h_ref[...]                                   # (Bt, S, H), native dtype
    w = w_ref[...].astype(h.dtype)                   # (1, H)

    # scores over the lane (H) axis -> lane-dense (Bt, S), accumulated in f32.
    scores = jnp.sum(h * w, axis=-1, dtype=jnp.float32)          # (Bt, S)

    # Numerically-stable softmax over the sequence axis (f32 only on (Bt, S)).
    # (Linear bias omitted: softmax is invariant to a per-row constant.)
    m = jnp.max(scores, axis=-1, keepdims=True)                  # (Bt, 1)
    e = jnp.exp(scores - m)                                      # (Bt, S)
    denom = jnp.sum(e, axis=-1, keepdims=True)                   # (Bt, 1)

    # context = sum_S(weights * hidden): batched MXU contraction over S with
    # f32 accumulation; normalize once on the small (Bt, H) result with an
    # exact divide (fixes the approx-reciprocal accuracy failure).
    wts3 = e[:, None, :].astype(h.dtype)                         # (Bt, 1, S)
    ctx = jnp.einsum("bqs,bsh->bqh", wts3, h,
                     preferred_element_type=jnp.float32)[:, 0, :]  # (Bt, H)
    o_ref[...] = (ctx / denom).astype(o_ref.dtype)


def _choose_batch_tile(B, S, H, itemsize,
                       target_bytes=8 << 20, max_bytes=12 << 20):
    """Pick a batch tile so each (Bt, S, H) input block is ~8 MiB (<=12 MiB):
    large enough to amortize per-grid-step overhead, small enough that the
    double-buffered input + output fits VMEM on every TPU generation."""
    row_bytes = S * H * itemsize
    bt = max(1, min(target_bytes, max_bytes) // row_bytes)
    if bt >= B:
        return B                       # whole batch in one block, no padding
    bt = max(8, (bt // 8) * 8)         # multiple of 8 -> dense output stores
    # Prefer >= 2 grid steps so both v7x TensorCores get work.
    while bt > 8 and pl.cdiv(B, bt) < 2:
        bt = max(8, ((bt // 2) // 8) * 8)
    # Note: for very large S*H (8-row block > ~12 MiB) an S-split "arbitrary"
    # grid axis with an online-softmax accumulator would cap VMEM further;
    # not needed at these shapes.
    return bt


def attention_forward(hidden_states, weight, bias=None):
    """hidden_states: (B, S, H); weight: (1, H) torch nn.Linear layout;
    bias: (1,) -- accepted for API parity but mathematically a no-op here
    (softmax over the sequence axis is invariant to a per-row constant)."""
    del bias
    B, S, H = hidden_states.shape
    dtype = hidden_states.dtype
    itemsize = jnp.dtype(dtype).itemsize

    bt = _choose_batch_tile(B, S, H, itemsize)
    grid = (pl.cdiv(B, bt),)

    w2 = weight.reshape(1, H)          # lane-dense weight

    block_bytes = bt * S * H * itemsize
    out_block_bytes = bt * H * itemsize
    # 2x double-buffered input + double-buffered output + weight + headroom;
    # floor at 32 MiB (covers v5e's 16 MiB scoped default, < v7x's 64 MiB).
    vmem_bytes = int(min(96 << 20,
                         max(32 << 20,
                             2 * block_bytes + 2 * out_block_bytes
                             + 2 * H * 4 + (4 << 20))))

    cost = pl.CostEstimate(
        flops=4 * B * S * H,                      # scores + context matmuls
        transcendentals=B * S,                    # exp
        bytes_accessed=B * S * H * itemsize + B * H * itemsize + H * 4,
    )

    out = pl.pallas_call(
        _attention_kernel,
        out_shape=jax.ShapeDtypeStruct((B, H), dtype),
        grid_spec=pltpu.PrefetchScalarGridSpec(
            num_scalar_prefetch=0,
            grid=grid,
            in_specs=[
                pl.BlockSpec((bt, S, H), lambda i: (i, 0, 0)),
                pl.BlockSpec((1, H), lambda i: (0, 0)),
            ],
            out_specs=pl.BlockSpec((bt, H), lambda i: (i, 0)),
        ),
        compiler_params=pltpu.CompilerParams(
            dimension_semantics=("parallel",),
            vmem_limit_bytes=vmem_bytes),
        cost_estimate=cost,
    )(hidden_states, w2)
    return out


def attention_reference(hidden_states, weight, bias):
    scores = hidden_states @ weight.T + bias          # (B, S, 1)
    w = jax.nn.softmax(scores, axis=1)                # softmax over seq
    return jnp.sum(w * hidden_states, axis=1)         # (B, H)


if __name__ == "__main__":
    B, S, H = 2, 8, 32
    key = jax.random.PRNGKey(0)
    k_x, k_w, k_b = jax.random.split(key, 3)

    hidden_states = jax.random.normal(k_x, (B, S, H), dtype=jnp.float32)
    # Deterministic init mimicking nn.Linear(H, 1): uniform(-1/sqrt(H), 1/sqrt(H))
    bound = 1.0 / (H ** 0.5)
    weight = jax.random.uniform(k_w, (1, H), dtype=jnp.float32,
                                minval=-bound, maxval=bound)
    bias = jax.random.uniform(k_b, (1,), dtype=jnp.float32,
                              minval=-bound, maxval=bound)

    out = attention_forward(hidden_states, weight, bias)
    jax.block_until_ready(out)

    ref = attention_reference(hidden_states, weight, bias)
    assert out.shape == (B, H)
    assert jnp.allclose(out, ref, atol=1e-4, rtol=1e-4), (
        f"max abs err {jnp.max(jnp.abs(out - ref))}")

    print("KERNEL_OK")
</pallas_src>

<mosaic_0001>
module attributes {stable_mosaic.version = 11 : i64} {
  func.func @_attention_kernel(%arg0: i32, %arg1: memref<2x8x32xf32, #tpu.memory_space<vmem>>, %arg2: memref<1x32xf32, #tpu.memory_space<vmem>>, %arg3: memref<2x32xf32, #tpu.memory_space<vmem>>) attributes {dimension_semantics = [#tpu.dimension_semantics<parallel>], iteration_bounds = array<i64: 1>, scalar_prefetch = 0 : i64, scratch_operands = 0 : i64, tpu.core_type = #tpu.core_type<tc>, window_params = [{transform_indices = @transform_0, window_bounds = array<i64: 2, 8, 32>}, {pipeline_mode = #tpu.pipeline_mode<synchronous>, transform_indices = @transform_1, window_bounds = array<i64: 1, 32>}, {transform_indices = @transform_2, window_bounds = array<i64: 2, 32>}]} {
    %c0 = arith.constant 0 : index
    %c0_0 = arith.constant 0 : index
    %c0_1 = arith.constant 0 : index
    %0 = vector.load %arg1[%c0, %c0_0, %c0_1] : memref<2x8x32xf32, #tpu.memory_space<vmem>>, vector<2x8x32xf32>
    %c0_2 = arith.constant 0 : index
    %c0_3 = arith.constant 0 : index
    %1 = vector.load %arg2[%c0_2, %c0_3] : memref<1x32xf32, #tpu.memory_space<vmem>>, vector<1x32xf32>
    %2 = vector.shape_cast %1 : vector<1x32xf32> to vector<1x1x32xf32>
    %3 = vector.broadcast %2 : vector<1x1x32xf32> to vector<2x8x32xf32>
    %4 = arith.mulf %0, %3 : vector<2x8x32xf32>
    %cst = arith.constant dense<0.000000e+00> : vector<2x8xf32>
    %5 = vector.multi_reduction <add>, %4, %cst [2] : vector<2x8x32xf32> to vector<2x8xf32>
    %cst_4 = arith.constant dense<0xFF800000> : vector<2xf32>
    %6 = vector.multi_reduction <maximumf>, %5, %cst_4 [1] : vector<2x8xf32> to vector<2xf32>
    %7 = vector.shape_cast %6 : vector<2xf32> to vector<2x1xf32>
    %8 = vector.broadcast %7 : vector<2x1xf32> to vector<2x8xf32>
    %9 = arith.subf %5, %8 : vector<2x8xf32>
    %10 = math.exp %9 : vector<2x8xf32>
    %cst_5 = arith.constant dense<0.000000e+00> : vector<2xf32>
    %11 = vector.multi_reduction <add>, %10, %cst_5 [1] : vector<2x8xf32> to vector<2xf32>
    %12 = vector.shape_cast %11 : vector<2xf32> to vector<2x1xf32>
    %13 = vector.shape_cast %10 : vector<2x8xf32> to vector<2x1x8xf32>
    "tpu.trace_start"() <{level = 10 : i32, message = "bqs,bsh->bqh"}> : () -> ()
    %cst_6 = arith.constant dense<0.000000e+00> : vector<2x1x32xf32>
    %14 = tpu.matmul %13, %0, %cst_6 {dimension_numbers = #tpu.dot_dimension_numbers<[2], [1], [1], [2], [0, 0, 0, 1, 1, 2], [0], [0]>} : vector<2x1x8xf32>, vector<2x8x32xf32>, vector<2x1x32xf32> -> vector<2x1x32xf32>
    "tpu.trace_stop"() : () -> ()
    %15 = vector.shape_cast %14 : vector<2x1x32xf32> to vector<2x32xf32>
    %16 = vector.broadcast %12 : vector<2x1xf32> to vector<2x32xf32>
    %17 = arith.divf %15, %16 : vector<2x32xf32>
    %c0_7 = arith.constant 0 : index
    %c0_8 = arith.constant 0 : index
    %18 = vector.load %arg3[%c0_7, %c0_8] : memref<2x32xf32, #tpu.memory_space<vmem>>, vector<2x32xf32>
    tpu.vector_store %arg3[%c0_7, %c0_8], %17 {strides = array<i32>} : memref<2x32xf32, #tpu.memory_space<vmem>>, vector<2x32xf32>,
    return
  }
  func.func @transform_0(%arg0: i32) -> (i32, i32, i32) {
    %c0_i32 = arith.constant 0 : i32
    %c0_i32_0 = arith.constant 0 : i32
    %c0_i32_1 = arith.constant 0 : i32
    return %arg0, %c0_i32, %c0_i32_0 : i32, i32, i32
  }
  func.func @transform_1(%arg0: i32) -> (i32, i32) {
    %c0_i32 = arith.constant 0 : i32
    %c0_i32_0 = arith.constant 0 : i32
    %c0_i32_1 = arith.constant 0 : i32
    return %c0_i32, %c0_i32_0 : i32, i32
  }
  func.func @transform_2(%arg0: i32) -> (i32, i32) {
    %c0_i32 = arith.constant 0 : i32
    %c0_i32_0 = arith.constant 0 : i32
    return %arg0, %c0_i32 : i32, i32
  }
}

</mosaic_0001>

<llo_original>
// kernel: tpu_custom_call.1
$region0: #{tpu_custom_call.1}
  #allocation0 [shape = 'u32[]', space=smem, size = 0x4, offset = 0x4, fixed_abs, tag = 'smem constant byte address 0x4 - core index']
  #allocation1 [shape = 'u32[144,128]{1,0:T(1,128)}', space=vmem, size = 0x12000, scoped, tag = 'internal scratch']
  %s0 = inlined_call_operand.hbm [shape: f32[2,8,32], index: 0, kind: input, shape index: {}]
  %s1 = inlined_call_operand.vmem [shape: f32[1,32], index: 1, kind: input, shape index: {}]
  %s2 = inlined_call_operand.hbm [shape: f32[2,32], index: 2, kind: output, shape index: {}]
  %s3 = sld [smem:[#allocation0]]
  $region22: #{tpu_custom_call.1} parent=0
    _
  %s5 = ssub.s32 1, %s3
  %s6 = scalar_select 0, %s5, %s3
  $region1: #{tpu_custom_call.1} parent=0
    #allocation2 [shape = 'u8[8192]{0}', space=vmem, size = 0x2000, scoped, tag = 'input window, operand 0, single buffered']
    #allocation3 [shape = 's32[1]{0}', space=sflag, size = 0x4, scoped, tag = 'scoped memory for tpu_custom_call.1']
    #allocation4 [shape = 's32[1]{0}', space=sflag, size = 0x4, scoped, tag = 'scoped memory for tpu_custom_call.1']
    #allocation5 [shape = 'u8[1024]{0}', space=vmem, size = 0x400, scoped, tag = 'output window, operand 0, single buffered']
    %7 = vsyncpa [#allocation3], 0
    %8 = vsyncpa [#allocation4], 0
    // Predicated region
    $region2: #{tpu_custom_call.1} parent=1 // pred_check
      _
    $region3: #{tpu_custom_call.1} parent=1 // pred_check_branch
      %10 = sbr.rel (0) target = $region5
    $region4: #{tpu_custom_call.1} parent=1 // pred_region
      %s12 = ssub.s32 256, 256
      %13 = vsyncadd [#allocation3], %s12
      %s14 = sshll.u32 [#allocation2], 4
      %s15 = int_to_ptr.vmem [resolvable:$true] %s14
      %20 = dma.hbm_to_vmem [thread:$0]  %s0, 256, %s15, [#allocation3], 128, 128, 8
    $region5: #{tpu_custom_call.1} parent=1 // pred_fallthru
      _
    // Predicated region
    $region6: #{tpu_custom_call.1} parent=1 // pred_check
      _
    $region7: #{tpu_custom_call.1} parent=1 // pred_check_branch
      %22 = sbr.rel (0) target = $region9
    $region8: #{tpu_custom_call.1} parent=1 // pred_region
      _
    $region9: #{tpu_custom_call.1} parent=1 // pred_fallthru
      _
    // Predicated region
    $region10: #{tpu_custom_call.1} parent=1 // pred_check
      _
    $region11: #{tpu_custom_call.1} parent=1 // pred_check_branch
      %24 = sbr.rel (0) target = $region13
    $region12: #{tpu_custom_call.1} parent=1 // pred_region
      %25 = dma.done [#allocation3], 256
    $region13: #{tpu_custom_call.1} parent=1 // pred_fallthru
      _
    %v26 = vld [vmem:[#allocation2] sm:$0xff]
    %v27 = vld [vmem:[#allocation2 + $0x8] sm:$0xff]
    %v28 = vld [vmem:[%s1] sm:$0x1]
    %v30 = vlaneseq
    %v31 = vshrl.u32 %v30, 7
    %v32 = vsub.s32 0, %v31
    %v33 = vrot.slane %v28, %v32
    %v35 = vmul.f32 %v26, %v33
    %v36 = vmul.f32 %v27, %v33
    %vm37 = vcmask 261120
    %v38 = vsel %vm37, %v35, 0.0
    %39 = vadd.xlane.f32.xlu0 %v38
    %v40 = vpop.xlane.xlu0 %39
    %v41 = vsel %vm37, %v36, 0.0
    %42 = vadd.xlane.f32.xlu0 %v41
    %v43 = vpop.xlane.xlu0 %42
    %v46 = vlaneseq
    %v47 = vand.u32 %v46, 127
    %v48 = vlaneseq
    %v49 = vshrl.u32 %v48, 7
    %v50 = vsub.s32 %v47, %v49
    %v51 = vrot.slane %v40, %v50
    %v52 = vlaneseq
    %v53 = vshrl.u32 %v52, 7
    %v54 = vsub.s32 %v47, %v53
    %v55 = vrot.slane %v43, %v54
    %vm56 = vcmask 1041409
    %v57 = vsel %vm56, %v55, %v51
    %vm59 = vcmask 58368
    %v60 = vsel %vm59, %v57, -inf
    %61 = vmax.xlane.f32.xlu0 %v60
    %v62 = vpop.xlane.xlu0 %61
    %v64 = vlaneseq
    %v65 = vshrl.u32 %v64, 7
    %v66 = vsub.s32 0, %v65
    %v67 = vrot.slane %v62, %v66
    %v68 = vlaneseq
    %v69 = vshrl.u32 %v68, 7
    %v70 = vsub.s32 1, %v69
    %v71 = vrot.slane %v62, %v70
    %v74 = vsub.f32 %v40, %v67
    %v75 = vsub.f32 %v43, %v71
    %v76 = vmul.f32 %v74, 1.442695
    %v77 = vpow.pop %v76
    %v78 = vmul.f32 %v75, 1.442695
    %v79 = vpow.pop %v78
    %82 = vset.pattern.permute.xlu0 0
    %83 = vperm.xlu0 %82, %v77
    %v84 = vpop.permute.xlu0 %83
    %85 = vset.pattern.permute.xlu0 0
    %86 = vperm.xlu0 %85, %v79
    %v87 = vpop.permute.xlu0 %86
    %v88 = vlaneseq
    %v89 = vshrl.u32 %v88, 7
    %v90 = vsub.s32 %v47, %v89
    %v91 = vrot.slane %v84, %v90
    %v92 = vlaneseq
    %v93 = vshrl.u32 %v92, 7
    %v94 = vsub.s32 %v47, %v93
    %v95 = vrot.slane %v87, %v94
    %v96 = vsel %vm56, %v95, %v91
    %v98 = vsel %vm59, %v96, 0.0
    %99 = vadd.xlane.f32.xlu0 %v98
    %v100 = vpop.xlane.xlu0 %99
    %vm101 = vcmask 64512
    %v102 = vsel %vm101, %v91, 0
    %104 = vmatprep.subr.mxu0 0.0
    %105 = vmatpush1.msra.mxu0 0.0
    %106 = vmatprep.subr.mxu0 0.0
    %107 = vmatpush1.msra.mxu0 0.0
    %108 = vmatprep.subr.mxu0 0.0
    %109 = vmatpush1.msra.mxu0 0.0
    %110 = vmatprep.subr.mxu0 0.0
    %111 = vmatpush1.msra.mxu0 0.0
    %112 = vmatprep.subr.mxu0 0.0
    %113 = vmatpush1.msra.mxu0 0.0
    %114 = vmatprep.subr.mxu0 0.0
    %115 = vmatpush1.msra.mxu0 0.0
    %116 = vmatprep.subr.mxu0 0.0
    %117 = vmatpush1.msra.mxu0 0.0
    %118 = vmatprep.subr.mxu0 0.0
    %119 = vmatpush1.msra.mxu0 0.0
    %120 = vmatprep.subr.mxu0 0.0
    %121 = vmatpush1.msra.mxu0 0.0
    %122 = vmatprep.subr.mxu0 0.0
    %123 = vmatpush1.msra.mxu0 0.0
    %124 = vmatprep.subr.mxu0 0.0
    %125 = vmatpush1.msra.mxu0 0.0
    %126 = vmatprep.subr.mxu0 0.0
    %127 = vmatpush1.msra.mxu0 0.0
    %128 = vmatprep.subr.mxu0 0.0
    %129 = vmatpush1.msra.mxu0 0.0
    %130 = vmatprep.subr.mxu0 0.0
    %131 = vmatpush1.msra.mxu0 0.0
    %132 = vmatprep.subr.mxu0 0.0
    %133 = vmatpush1.msra.mxu0 0.0
    %134 = vmatprep.subr.mxu0 0.0
    %135 = vmatpush1.msra.mxu0 %v26
    %136 = vmatprep.subr.mxu0 0.0
    %137 = vmatpush2.msra.mxu0 0.0
    %138 = vmatprep.subr.mxu0 0.0
    %139 = vmatpush2.msra.mxu0 0.0
    %140 = vmatprep.subr.mxu0 0.0
    %141 = vmatpush2.msra.mxu0 0.0
    %142 = vmatprep.subr.mxu0 0.0
    %143 = vmatpush2.msra.mxu0 0.0
    %144 = vmatprep.subr.mxu0 0.0
    %145 = vmatpush2.msra.mxu0 0.0
    %146 = vmatprep.subr.mxu0 0.0
    %147 = vmatpush2.msra.mxu0 0.0
    %148 = vmatprep.subr.mxu0 0.0
    %149 = vmatpush2.msra.mxu0 0.0
    %150 = vmatprep.subr.mxu0 0.0
    %151 = vmatpush2.msra.mxu0 0.0
    %152 = vmatprep.subr.mxu0 0.0
    %153 = vmatpush2.msra.mxu0 0.0
    %154 = vmatprep.subr.mxu0 0.0
    %155 = vmatpush2.msra.mxu0 0.0
    %156 = vmatprep.subr.mxu0 0.0
    %157 = vmatpush2.msra.mxu0 0.0
    %158 = vmatprep.subr.mxu0 0.0
    %159 = vmatpush2.msra.mxu0 0.0
    %160 = vmatprep.subr.mxu0 0.0
    %161 = vmatpush2.msra.mxu0 0.0
    %162 = vmatprep.subr.mxu0 0.0
    %163 = vmatpush2.msra.mxu0 0.0
    %164 = vmatprep.subr.mxu0 0.0
    %165 = vmatpush2.msra.mxu0 0.0
    %166 = vmatprep.subr.mxu0 0.0
    %167 = vmatpush2.msra.mxu0 0.0
    %168 = vmatprep.mubr.f32.mxu0 0.0
    %169 = vmatmul.mubr.f32.gmra.mxu0 %v102
    %v170 = vpop.f32.mrf.mxu0
    %v171 = vadd.f32 0.0, %v170
    %v172 = vpop.f32.mrf.mxu0
    %173 = vdwg.mxu0
    %v174 = vsel %vm101, %v95, 0
    %176 = vmatprep.subr.mxu0 0.0
    %177 = vmatpush1.msra.mxu0 0.0
    %178 = vmatprep.subr.mxu0 0.0
    %179 = vmatpush1.msra.mxu0 0.0
    %180 = vmatprep.subr.mxu0 0.0
    %181 = vmatpush1.msra.mxu0 0.0
    %182 = vmatprep.subr.mxu0 0.0
    %183 = vmatpush1.msra.mxu0 0.0
    %184 = vmatprep.subr.mxu0 0.0
    %185 = vmatpush1.msra.mxu0 0.0
    %186 = vmatprep.subr.mxu0 0.0
    %187 = vmatpush1.msra.mxu0 0.0
    %188 = vmatprep.subr.mxu0 0.0
    %189 = vmatpush1.msra.mxu0 0.0
    %190 = vmatprep.subr.mxu0 0.0
    %191 = vmatpush1.msra.mxu0 0.0
    %192 = vmatprep.subr.mxu0 0.0
    %193 = vmatpush1.msra.mxu0 0.0
    %194 = vmatprep.subr.mxu0 0.0
    %195 = vmatpush1.msra.mxu0 0.0
    %196 = vmatprep.subr.mxu0 0.0
    %197 = vmatpush1.msra.mxu0 0.0
    %198 = vmatprep.subr.mxu0 0.0
    %199 = vmatpush1.msra.mxu0 0.0
    %200 = vmatprep.subr.mxu0 0.0
    %201 = vmatpush1.msra.mxu0 0.0
    %202 = vmatprep.subr.mxu0 0.0
    %203 = vmatpush1.msra.mxu0 0.0
    %204 = vmatprep.subr.mxu0 0.0
    %205 = vmatpush1.msra.mxu0 0.0
    %206 = vmatprep.subr.mxu0 0.0
    %207 = vmatpush1.msra.mxu0 %v27
    %208 = vmatprep.subr.mxu0 0.0
    %209 = vmatpush2.msra.mxu0 0.0
    %210 = vmatprep.subr.mxu0 0.0
    %211 = vmatpush2.msra.mxu0 0.0
    %212 = vmatprep.subr.mxu0 0.0
    %213 = vmatpush2.msra.mxu0 0.0
    %214 = vmatprep.subr.mxu0 0.0
    %215 = vmatpush2.msra.mxu0 0.0
    %216 = vmatprep.subr.mxu0 0.0
    %217 = vmatpush2.msra.mxu0 0.0
    %218 = vmatprep.subr.mxu0 0.0
    %219 = vmatpush2.msra.mxu0 0.0
    %220 = vmatprep.subr.mxu0 0.0
    %221 = vmatpush2.msra.mxu0 0.0
    %222 = vmatprep.subr.mxu0 0.0
    %223 = vmatpush2.msra.mxu0 0.0
    %224 = vmatprep.subr.mxu0 0.0
    %225 = vmatpush2.msra.mxu0 0.0
    %226 = vmatprep.subr.mxu0 0.0
    %227 = vmatpush2.msra.mxu0 0.0
    %228 = vmatprep.subr.mxu0 0.0
    %229 = vmatpush2.msra.mxu0 0.0
    %230 = vmatprep.subr.mxu0 0.0
    %231 = vmatpush2.msra.mxu0 0.0
    %232 = vmatprep.subr.mxu0 0.0
    %233 = vmatpush2.msra.mxu0 0.0
    %234 = vmatprep.subr.mxu0 0.0
    %235 = vmatpush2.msra.mxu0 0.0
    %236 = vmatprep.subr.mxu0 0.0
    %237 = vmatpush2.msra.mxu0 0.0
    %238 = vmatprep.subr.mxu0 0.0
    %239 = vmatpush2.msra.mxu0 0.0
    %240 = vmatprep.mubr.f32.mxu0 0.0
    %241 = vmatmul.mubr.f32.gmra.mxu0 %v174
    %v242 = vpop.f32.mrf.mxu0
    %v243 = vadd.f32 0.0, %v242
    %v244 = vpop.f32.mrf.mxu0
    %245 = vdwg.mxu0
    %v247 = vrot.slane %v100, 1
    %v250 = vrcp.pop %v100
    %v251 = vmul.f32 %v171, %v250
    %v252 = vrcp.pop %v247
    %v253 = vmul.f32 %v243, %v252
    %v256 = vrot.slane %v253, 7
    %v257 = vsel %vm56, %v256, %v251
    %vm259 = vcmask 254976
    %260 = vst.msk [vmem:[#allocation5] sm:$0x3] %vm259, %v257
    // Predicated region
    $region14: #{tpu_custom_call.1} parent=1 // pred_check
      _
    $region15: #{tpu_custom_call.1} parent=1 // pred_check_branch
      %262 = sbr.rel (0) target = $region17
    $region16: #{tpu_custom_call.1} parent=1 // pred_region
      %s264 = ssub.s32 32, 32
      %265 = vsyncadd [#allocation4], %s264
      %s267 = sshll.u32 [#allocation5], 4
      %s268 = int_to_ptr.vmem [resolvable:$true] %s267
      %270 = dma.vmem_to_hbm [thread:$0]  %s268, 32, %s2, [#allocation4]
    $region17: #{tpu_custom_call.1} parent=1 // pred_fallthru
      _
    // Predicated region
    $region18: #{tpu_custom_call.1} parent=1 // pred_check
      _
    $region19: #{tpu_custom_call.1} parent=1 // pred_check_branch
      %272 = sbr.rel (0) target = $region21
    $region20: #{tpu_custom_call.1} parent=1 // pred_region
      %273 = dma.done [#allocation4], 32
    $region21: #{tpu_custom_call.1} parent=1 // pred_fallthru
      _
    %274 = vsyncpa [#allocation3], 1
    %275 = vsyncpa [#allocation4], 1

</llo_original>
